<compile_context>
chip_gen: v6e
topology: v6e:2x2x1
jax: 0.10.0
libtpu: 0.0.40
codegen_flags: <defaults>
</compile_context>

<pallas_src>
import jax
import jax.numpy as jnp
from jax.experimental import pallas as pl
from jax.experimental.pallas import tpu as pltpu
from jax.scipy.special import gammaln

EPS_BETA = 1e-7  # matches beta_log_prob's eps

# packed-parameter vector layout (f32, lives in SMEM):
#   [ 0:16]  Encoder.B   (row-major [d_out, d_in])
#   [16:32]  Encoder.Bf
#   [32:36]  Encoder.w1
#   [36:40]  Encoder.w2
#   [40:44]  Encoder.classifier
#   [44]     Encoder.b
#   [45:49]  alpha_mi, beta_mi, alpha_mr, beta_mr  (already clamped to >= 0.1)
#   [49:51]  lgamma-consts c_mi, c_mr
#   [51:53]  log(sigmoid(P_mi)), log(sigmoid(P_mr))
_OFF_B, _OFF_BF, _OFF_W1, _OFF_W2, _OFF_CLS, _OFF_SC = 0, 16, 32, 36, 40, 44
_NPARAMS = 53


def agito_kernel(u_ref, p_ref, out_ref):
    """Full Agito forward for one batch tile.

    u_ref:   [4, bt, L+1]  embedded sequence (bf16/f32), time extended by 1 dup step
    p_ref:   [53] f32 SMEM packed weights + scalars
    out_ref: [bt, 2] f32   col 0 = posterior ratio, col 1 = mean(final_output)
    """
    D, bt, Lp1 = u_ref.shape
    L = Lp1 - 1

    def sig(x):  # sigmoid via EUP tanh: numerically stable, no VALU divide
        return 0.5 * jnp.tanh(0.5 * x) + 0.5

    # Per-feature [bt, L] slabs, lane-dense in time; upcast storage dtype -> f32.
    ue = [u_ref[d].astype(jnp.float32) for d in range(D)]      # [bt, L+1]
    u_t = [x[:, 0:L] for x in ue]        # u[t]
    u_n = [x[:, 1:Lp1] for x in ue]      # u[t+1] (last col duplicates u[L-1]; fixed below)

    # Boundary masks on the lane (time) axis: a single [1, L] iota (not a full
    # [B, L, D] int32 iota as before).
    t_idx = jax.lax.broadcasted_iota(jnp.int32, (1, L), 1)
    is_first = t_idx == 0
    is_last = t_idx == L - 1

    # Unrolled 4x4 linears: out[d] = sum_k W[d, k] * in[k]  -> pure VPU FMAs from
    # SMEM scalars; no padded [.., 4, 4] vregs, no cross-lane reduce.
    def lin4(xs, off):
        out = []
        for d in range(D):
            acc = p_ref[off + 4 * d] * xs[0]
            for k in range(1, D):
                acc = acc + p_ref[off + 4 * d + k] * xs[k]
            out.append(acc)
        return out

    xf_lin = lin4(u_t, _OFF_B)     # B  @ u[t]
    xb_lin = lin4(u_n, _OFF_BF)    # Bf @ u[t+1]
    x_fwd = [jnp.where(is_first, u_t[d], xf_lin[d]) for d in range(D)]
    x_bwd = [jnp.where(is_last, u_t[d], xb_lin[d]) for d in range(D)]

    # Gate, gated output and classifier projection, all fused per feature.
    g = p_ref[_OFF_SC + 0]                      # Encoder.b
    for d in range(D):
        g = g + p_ref[_OFF_W1 + d] * x_fwd[d] + p_ref[_OFF_W2 + d] * x_bwd[d]
    gamma = sig(g)                              # [bt, L]
    gamma_c = 1.0 - gamma

    zlog = None
    for d in range(D):
        y_d = gamma * (x_fwd[d] + x_bwd[d]) + gamma_c * u_t[d]
        term = p_ref[_OFF_CLS + d] * y_d
        zlog = term if zlog is None else zlog + term
    z = sig(zlog)                               # [bt, L] == final_output

    # Fused beta-mixture posterior: three shared lane reductions, then scalar math:
    #   lb = (a - 1) * S1 + (b - 1) * S2 - L * C
    zc = jnp.clip(z, EPS_BETA, 1.0 - EPS_BETA)
    s1 = jnp.sum(jnp.log(zc), axis=1, keepdims=True)          # [bt, 1]
    s2 = jnp.sum(jnp.log(1.0 - zc), axis=1, keepdims=True)    # [bt, 1]
    sz = jnp.sum(z, axis=1, keepdims=True)                    # [bt, 1]

    a_mi = p_ref[_OFF_SC + 1]; b_mi = p_ref[_OFF_SC + 2]
    a_mr = p_ref[_OFF_SC + 3]; b_mr = p_ref[_OFF_SC + 4]
    c_mi = p_ref[_OFF_SC + 5]; c_mr = p_ref[_OFF_SC + 6]
    lsig_pmi = p_ref[_OFF_SC + 7]; lsig_pmr = p_ref[_OFF_SC + 8]

    lb_mi = (a_mi - 1.0) * s1 + (b_mi - 1.0) * s2 - float(L) * c_mi
    lb_mr = (a_mr - 1.0) * s1 + (b_mr - 1.0) * s2 - float(L) * c_mr

    log_num = lb_mr + lsig_pmr
    log_alt = lb_mi + lsig_pmi
    m = jnp.maximum(log_num, log_alt)
    log_den = m + jnp.log(jnp.exp(log_num - m) + jnp.exp(log_alt - m))

    out_ref[:, 0:1] = jnp.exp(log_num - log_den)   # posterior ratio
    out_ref[:, 1:2] = sz * (1.0 / L)               # mean over time of final_output


def _embed_u(indices, params, dtype):
    """Embedding lookup, re-laid out lane-dense: [B, L, D] -> [D, B, L]."""
    return jnp.moveaxis(params['emb'][indices], -1, 0).astype(dtype)


def make_params(key, vocab_size=5, dim=4):
    """Deterministic parameter init (shapes from DNAEmbedding/Encoder __init__)."""
    ks = jax.random.split(key, 6)
    # DNAEmbedding, window_size=1: vocab {A,C,G,T,N} -> each base is its own group,
    # so the init is effectively an independent random vector per token.
    emb = jax.random.normal(ks[0], (vocab_size, dim), jnp.float32)

    def lin(k, dout, din):
        bound = 1.0 / jnp.sqrt(jnp.float32(din))
        return jax.random.uniform(k, (dout, din), jnp.float32, -bound, bound)

    return dict(
        emb=emb,
        B=lin(ks[1], dim, dim),     # Encoder.B   (A multiplies zeros -> unused)
        Bf=lin(ks[2], dim, dim),    # Encoder.Bf  (Af multiplies zeros -> unused)
        w1=lin(ks[3], 1, dim),
        w2=lin(ks[4], 1, dim),
        cls=lin(ks[5], 1, dim),
        b=jnp.float32(0.0),         # Encoder.b
    )


def agito_forward(indices, params, *, alpha_mi, beta_mi, alpha_mr, beta_mr,
                  P_mi=0.5, P_mr=0.5, input_dtype=jnp.bfloat16, b_tile_max=256):
    """Agito forward.  Returns (posterior ratio [B], mean final_output [B])."""
    # TODO(synk): the host-side DNA string -> k-mer-id tokenization (Python dict in
    # DNAEmbedding) has no device equivalent; the kernel consumes integer token ids.
    u = _embed_u(indices, params, input_dtype)               # [D, B, L] (bf16 over HBM)
    D, B, L = u.shape

    # One duplicated trailing time-step so the kernel reads u[t] and u[t+1] from the
    # same VMEM block (replaces the old second HBM input `u_next`).
    u_ext = jnp.concatenate([u, u[:, :, -1:]], axis=-1)      # [D, B, L+1]

    # Batch tiling: time is the lane axis; batch rides the sublane axis and the grid.
    # b_tile_max must be a multiple of 16 (bf16 sublane tiling) when tiles are partial.
    if B > b_tile_max:
        b_tile = b_tile_max
        B_pad = -(-B // b_tile) * b_tile
        u_ext = jnp.pad(u_ext, ((0, 0), (0, B_pad - B), (0, 0)))
    else:
        b_tile, B_pad = B, B
    # TODO(synk): for very long L, additionally tile the time axis ("arbitrary") with a
    # pl.when-gated accumulator for the three L-reductions.

    # clamp(min=0.1) fidelity from Agito.__init__
    a_mi = max(float(alpha_mi), 0.1)
    b_mi = max(float(beta_mi), 0.1)
    a_mr = max(float(alpha_mr), 0.1)
    b_mr = max(float(beta_mr), 0.1)
    c_mi = gammaln(a_mi) + gammaln(b_mi) - gammaln(a_mi + b_mi)
    c_mr = gammaln(a_mr) + gammaln(b_mr) - gammaln(a_mr + b_mr)
    log_sig_pmi = jnp.log(jax.nn.sigmoid(jnp.float32(P_mi)))
    log_sig_pmr = jnp.log(jax.nn.sigmoid(jnp.float32(P_mr)))

    pvec = jnp.concatenate([
        params['B'].reshape(-1).astype(jnp.float32),
        params['Bf'].reshape(-1).astype(jnp.float32),
        params['w1'].reshape(-1).astype(jnp.float32),
        params['w2'].reshape(-1).astype(jnp.float32),
        params['cls'].reshape(-1).astype(jnp.float32),
        jnp.array([params['b'], a_mi, b_mi, a_mr, b_mr,
                   c_mi, c_mr, log_sig_pmi, log_sig_pmr], dtype=jnp.float32),
    ])
    assert pvec.shape[0] == _NPARAMS

    out = pl.pallas_call(
        agito_kernel,
        grid=(B_pad // b_tile,),
        in_specs=[
            pl.BlockSpec((D, b_tile, L + 1), lambda i: (0, i, 0)),
            pl.BlockSpec(memory_space=pltpu.MemorySpace.SMEM),   # packed params
        ],
        out_specs=pl.BlockSpec((b_tile, 2), lambda i: (i, 0)),
        out_shape=jax.ShapeDtypeStruct((B_pad, 2), jnp.float32),
        compiler_params=pltpu.CompilerParams(
            # batch-tile axis is embarrassingly parallel -> shards over v7x's 2 TCs
            dimension_semantics=("parallel",),
            vmem_limit_bytes=32 * 1024 * 1024,
        ),
    )(u_ext, pvec)

    return out[:B, 0], out[:B, 1]


def agito_reference(indices, params, *, alpha_mi, beta_mi, alpha_mr, beta_mr,
                    P_mi=0.5, P_mr=0.5, input_dtype=jnp.bfloat16):
    """Pure-JAX reference mirroring the PyTorch forward semantics.

    Uses the same (quantized) embedding output as the kernel so the comparison
    isolates kernel error from the bf16 storage rounding.
    """
    u = jnp.moveaxis(_embed_u(indices, params, input_dtype).astype(jnp.float32),
                     0, -1)                                    # [B, L, D] f32
    B, L, D = u.shape
    x_fwd = jnp.concatenate(
        [u[:, :1], jnp.einsum('bld,ed->ble', u[:, 1:], params['B'])], axis=1)
    x_bwd = jnp.concatenate(
        [jnp.einsum('bld,ed->ble', u[:, 1:], params['Bf']), u[:, -1:]], axis=1)
    gamma = jax.nn.sigmoid(x_fwd @ params['w1'].T + x_bwd @ params['w2'].T + params['b'])
    y = gamma * (x_fwd + x_bwd) + (1.0 - gamma) * u
    z = jax.nn.sigmoid(y @ params['cls'].T)[..., 0]

    def beta_log_prob(x, a, b):
        x = jnp.clip(x, EPS_BETA, 1.0 - EPS_BETA)
        return ((a - 1.0) * jnp.log(x) + (b - 1.0) * jnp.log(1.0 - x)
                - (gammaln(a) + gammaln(b) - gammaln(a + b)))

    a_mi = max(float(alpha_mi), 0.1); b_mi = max(float(beta_mi), 0.1)
    a_mr = max(float(alpha_mr), 0.1); b_mr = max(float(beta_mr), 0.1)
    lb_mi = beta_log_prob(z, a_mi, b_mi).sum(axis=1)
    lb_mr = beta_log_prob(z, a_mr, b_mr).sum(axis=1)
    log_num = lb_mr + jnp.log(jax.nn.sigmoid(jnp.float32(P_mr)))
    log_alt = lb_mi + jnp.log(jax.nn.sigmoid(jnp.float32(P_mi)))
    log_den = jax.scipy.special.logsumexp(jnp.stack([log_num, log_alt]), axis=0)
    return jnp.exp(log_num - log_den), z.mean(axis=1)


if __name__ == "__main__":
    key = jax.random.PRNGKey(0)
    kp, ki, ki2 = jax.random.split(key, 3)
    params = make_params(kp)
    hp = dict(alpha_mi=1.5, beta_mi=2.0, alpha_mr=0.7, beta_mr=1.2)

    # small shape: batch=2, seq_len=8, embed_dim=4
    B, L = 2, 8
    # token ids in {0:A, 1:C, 2:G, 3:T} (4 = 'N' padding, unused here)
    indices = jax.random.randint(ki, (B, L), 0, 4)
    ratio, mean_x = agito_forward(indices, params, **hp)
    jax.block_until_ready((ratio, mean_x))
    r_ref, m_ref = agito_reference(indices, params, **hp)
    assert jnp.allclose(ratio, r_ref, atol=2e-3, rtol=2e-3), (ratio, r_ref)
    assert jnp.allclose(mean_x, m_ref, atol=2e-3, rtol=2e-3), (mean_x, m_ref)

    # exercise the tiled / padded batch-grid path (B not a multiple of the tile)
    B2, L2 = 40, 8
    indices2 = jax.random.randint(ki2, (B2, L2), 0, 4)
    ratio2, mean2 = agito_forward(indices2, params, b_tile_max=16, **hp)
    jax.block_until_ready((ratio2, mean2))
    r2_ref, m2_ref = agito_reference(indices2, params, **hp)
    assert jnp.allclose(ratio2, r2_ref, atol=2e-3, rtol=2e-3)
    assert jnp.allclose(mean2, m2_ref, atol=2e-3, rtol=2e-3)

    print("KERNEL_OK")
</pallas_src>

<mosaic_0001>
module attributes {stable_mosaic.version = 11 : i64} {
  func.func @agito_kernel(%arg0: i32, %arg1: memref<4x2x9xbf16, #tpu.memory_space<vmem>>, %arg2: memref<53xf32, #tpu.memory_space<smem>>, %arg3: memref<2x2xf32, #tpu.memory_space<vmem>>) attributes {dimension_semantics = [#tpu.dimension_semantics<parallel>], iteration_bounds = array<i64: 1>, scalar_prefetch = 0 : i64, scratch_operands = 0 : i64, tpu.core_type = #tpu.core_type<tc>, window_params = [{transform_indices = @transform_0, window_bounds = array<i64: 4, 2, 9>}, {transform_indices = @transform_1, window_bounds = array<i64: 53>}, {transform_indices = @transform_2, window_bounds = array<i64: 2, 2>}]} {
    %c0 = arith.constant 0 : index
    %c0_0 = arith.constant 0 : index
    %c0_1 = arith.constant 0 : index
    %0 = vector.load %arg1[%c0, %c0_0, %c0_1] : memref<4x2x9xbf16, #tpu.memory_space<vmem>>, vector<1x2x9xbf16>
    %1 = vector.shape_cast %0 : vector<1x2x9xbf16> to vector<2x9xbf16>
    %2 = arith.extf %1 : vector<2x9xbf16> to vector<2x9xf32>
    %c1 = arith.constant 1 : index
    %c0_2 = arith.constant 0 : index
    %c0_3 = arith.constant 0 : index
    %3 = vector.load %arg1[%c1, %c0_2, %c0_3] : memref<4x2x9xbf16, #tpu.memory_space<vmem>>, vector<1x2x9xbf16>
    %4 = vector.shape_cast %3 : vector<1x2x9xbf16> to vector<2x9xbf16>
    %5 = arith.extf %4 : vector<2x9xbf16> to vector<2x9xf32>
    %c2 = arith.constant 2 : index
    %c0_4 = arith.constant 0 : index
    %c0_5 = arith.constant 0 : index
    %6 = vector.load %arg1[%c2, %c0_4, %c0_5] : memref<4x2x9xbf16, #tpu.memory_space<vmem>>, vector<1x2x9xbf16>
    %7 = vector.shape_cast %6 : vector<1x2x9xbf16> to vector<2x9xbf16>
    %8 = arith.extf %7 : vector<2x9xbf16> to vector<2x9xf32>
    %c3 = arith.constant 3 : index
    %c0_6 = arith.constant 0 : index
    %c0_7 = arith.constant 0 : index
    %9 = vector.load %arg1[%c3, %c0_6, %c0_7] : memref<4x2x9xbf16, #tpu.memory_space<vmem>>, vector<1x2x9xbf16>
    %10 = vector.shape_cast %9 : vector<1x2x9xbf16> to vector<2x9xbf16>
    %11 = arith.extf %10 : vector<2x9xbf16> to vector<2x9xf32>
    %12 = vector.extract_strided_slice %2 {offsets = [0, 0], sizes = [2, 8], strides = [1, 1]} : vector<2x9xf32> to vector<2x8xf32>
    %13 = vector.extract_strided_slice %5 {offsets = [0, 0], sizes = [2, 8], strides = [1, 1]} : vector<2x9xf32> to vector<2x8xf32>
    %14 = vector.extract_strided_slice %8 {offsets = [0, 0], sizes = [2, 8], strides = [1, 1]} : vector<2x9xf32> to vector<2x8xf32>
    %15 = vector.extract_strided_slice %11 {offsets = [0, 0], sizes = [2, 8], strides = [1, 1]} : vector<2x9xf32> to vector<2x8xf32>
    %16 = vector.extract_strided_slice %2 {offsets = [0, 1], sizes = [2, 8], strides = [1, 1]} : vector<2x9xf32> to vector<2x8xf32>
    %17 = vector.extract_strided_slice %5 {offsets = [0, 1], sizes = [2, 8], strides = [1, 1]} : vector<2x9xf32> to vector<2x8xf32>
    %18 = vector.extract_strided_slice %8 {offsets = [0, 1], sizes = [2, 8], strides = [1, 1]} : vector<2x9xf32> to vector<2x8xf32>
    %19 = vector.extract_strided_slice %11 {offsets = [0, 1], sizes = [2, 8], strides = [1, 1]} : vector<2x9xf32> to vector<2x8xf32>
    %20 = tpu.iota {dimensions = array<i32: 1>} : vector<1x8xi32>
    %c0_i32 = arith.constant 0 : i32
    %21 = vector.broadcast %c0_i32 : i32 to vector<1x8xi32>
    %22 = arith.cmpi eq, %20, %21 : vector<1x8xi32>
    %c7_i32 = arith.constant 7 : i32
    %23 = vector.broadcast %c7_i32 : i32 to vector<1x8xi32>
    %24 = arith.cmpi eq, %20, %23 : vector<1x8xi32>
    %c0_8 = arith.constant 0 : index
    %25 = memref.load %arg2[%c0_8] : memref<53xf32, #tpu.memory_space<smem>>
    %26 = vector.broadcast %25 : f32 to vector<2x8xf32>
    %27 = arith.mulf %26, %12 : vector<2x8xf32>
    %c1_9 = arith.constant 1 : index
    %28 = memref.load %arg2[%c1_9] : memref<53xf32, #tpu.memory_space<smem>>
    %29 = vector.broadcast %28 : f32 to vector<2x8xf32>
    %30 = arith.mulf %29, %13 : vector<2x8xf32>
    %31 = arith.addf %27, %30 : vector<2x8xf32>
    %c2_10 = arith.constant 2 : index
    %32 = memref.load %arg2[%c2_10] : memref<53xf32, #tpu.memory_space<smem>>
    %33 = vector.broadcast %32 : f32 to vector<2x8xf32>
    %34 = arith.mulf %33, %14 : vector<2x8xf32>
    %35 = arith.addf %31, %34 : vector<2x8xf32>
    %c3_11 = arith.constant 3 : index
    %36 = memref.load %arg2[%c3_11] : memref<53xf32, #tpu.memory_space<smem>>
    %37 = vector.broadcast %36 : f32 to vector<2x8xf32>
    %38 = arith.mulf %37, %15 : vector<2x8xf32>
    %39 = arith.addf %35, %38 : vector<2x8xf32>
    %c4 = arith.constant 4 : index
    %40 = memref.load %arg2[%c4] : memref<53xf32, #tpu.memory_space<smem>>
    %41 = vector.broadcast %40 : f32 to vector<2x8xf32>
    %42 = arith.mulf %41, %12 : vector<2x8xf32>
    %c5 = arith.constant 5 : index
    %43 = memref.load %arg2[%c5] : memref<53xf32, #tpu.memory_space<smem>>
    %44 = vector.broadcast %43 : f32 to vector<2x8xf32>
    %45 = arith.mulf %44, %13 : vector<2x8xf32>
    %46 = arith.addf %42, %45 : vector<2x8xf32>
    %c6 = arith.constant 6 : index
    %47 = memref.load %arg2[%c6] : memref<53xf32, #tpu.memory_space<smem>>
    %48 = vector.broadcast %47 : f32 to vector<2x8xf32>
    %49 = arith.mulf %48, %14 : vector<2x8xf32>
    %50 = arith.addf %46, %49 : vector<2x8xf32>
    %c7 = arith.constant 7 : index
    %51 = memref.load %arg2[%c7] : memref<53xf32, #tpu.memory_space<smem>>
    %52 = vector.broadcast %51 : f32 to vector<2x8xf32>
    %53 = arith.mulf %52, %15 : vector<2x8xf32>
    %54 = arith.addf %50, %53 : vector<2x8xf32>
    %c8 = arith.constant 8 : index
    %55 = memref.load %arg2[%c8] : memref<53xf32, #tpu.memory_space<smem>>
    %56 = vector.broadcast %55 : f32 to vector<2x8xf32>
    %57 = arith.mulf %56, %12 : vector<2x8xf32>
    %c9 = arith.constant 9 : index
    %58 = memref.load %arg2[%c9] : memref<53xf32, #tpu.memory_space<smem>>
    %59 = vector.broadcast %58 : f32 to vector<2x8xf32>
    %60 = arith.mulf %59, %13 : vector<2x8xf32>
    %61 = arith.addf %57, %60 : vector<2x8xf32>
    %c10 = arith.constant 10 : index
    %62 = memref.load %arg2[%c10] : memref<53xf32, #tpu.memory_space<smem>>
    %63 = vector.broadcast %62 : f32 to vector<2x8xf32>
    %64 = arith.mulf %63, %14 : vector<2x8xf32>
    %65 = arith.addf %61, %64 : vector<2x8xf32>
    %c11 = arith.constant 11 : index
    %66 = memref.load %arg2[%c11] : memref<53xf32, #tpu.memory_space<smem>>
    %67 = vector.broadcast %66 : f32 to vector<2x8xf32>
    %68 = arith.mulf %67, %15 : vector<2x8xf32>
    %69 = arith.addf %65, %68 : vector<2x8xf32>
    %c12 = arith.constant 12 : index
    %70 = memref.load %arg2[%c12] : memref<53xf32, #tpu.memory_space<smem>>
    %71 = vector.broadcast %70 : f32 to vector<2x8xf32>
    %72 = arith.mulf %71, %12 : vector<2x8xf32>
    %c13 = arith.constant 13 : index
    %73 = memref.load %arg2[%c13] : memref<53xf32, #tpu.memory_space<smem>>
    %74 = vector.broadcast %73 : f32 to vector<2x8xf32>
    %75 = arith.mulf %74, %13 : vector<2x8xf32>
    %76 = arith.addf %72, %75 : vector<2x8xf32>
    %c14 = arith.constant 14 : index
    %77 = memref.load %arg2[%c14] : memref<53xf32, #tpu.memory_space<smem>>
    %78 = vector.broadcast %77 : f32 to vector<2x8xf32>
    %79 = arith.mulf %78, %14 : vector<2x8xf32>
    %80 = arith.addf %76, %79 : vector<2x8xf32>
    %c15 = arith.constant 15 : index
    %81 = memref.load %arg2[%c15] : memref<53xf32, #tpu.memory_space<smem>>
    %82 = vector.broadcast %81 : f32 to vector<2x8xf32>
    %83 = arith.mulf %82, %15 : vector<2x8xf32>
    %84 = arith.addf %80, %83 : vector<2x8xf32>
    %c16 = arith.constant 16 : index
    %85 = memref.load %arg2[%c16] : memref<53xf32, #tpu.memory_space<smem>>
    %86 = vector.broadcast %85 : f32 to vector<2x8xf32>
    %87 = arith.mulf %86, %16 : vector<2x8xf32>
    %c17 = arith.constant 17 : index
    %88 = memref.load %arg2[%c17] : memref<53xf32, #tpu.memory_space<smem>>
    %89 = vector.broadcast %88 : f32 to vector<2x8xf32>
    %90 = arith.mulf %89, %17 : vector<2x8xf32>
    %91 = arith.addf %87, %90 : vector<2x8xf32>
    %c18 = arith.constant 18 : index
    %92 = memref.load %arg2[%c18] : memref<53xf32, #tpu.memory_space<smem>>
    %93 = vector.broadcast %92 : f32 to vector<2x8xf32>
    %94 = arith.mulf %93, %18 : vector<2x8xf32>
    %95 = arith.addf %91, %94 : vector<2x8xf32>
    %c19 = arith.constant 19 : index
    %96 = memref.load %arg2[%c19] : memref<53xf32, #tpu.memory_space<smem>>
    %97 = vector.broadcast %96 : f32 to vector<2x8xf32>
    %98 = arith.mulf %97, %19 : vector<2x8xf32>
    %99 = arith.addf %95, %98 : vector<2x8xf32>
    %c20 = arith.constant 20 : index
    %100 = memref.load %arg2[%c20] : memref<53xf32, #tpu.memory_space<smem>>
    %101 = vector.broadcast %100 : f32 to vector<2x8xf32>
    %102 = arith.mulf %101, %16 : vector<2x8xf32>
    %c21 = arith.constant 21 : index
    %103 = memref.load %arg2[%c21] : memref<53xf32, #tpu.memory_space<smem>>
    %104 = vector.broadcast %103 : f32 to vector<2x8xf32>
    %105 = arith.mulf %104, %17 : vector<2x8xf32>
    %106 = arith.addf %102, %105 : vector<2x8xf32>
    %c22 = arith.constant 22 : index
    %107 = memref.load %arg2[%c22] : memref<53xf32, #tpu.memory_space<smem>>
    %108 = vector.broadcast %107 : f32 to vector<2x8xf32>
    %109 = arith.mulf %108, %18 : vector<2x8xf32>
    %110 = arith.addf %106, %109 : vector<2x8xf32>
    %c23 = arith.constant 23 : index
    %111 = memref.load %arg2[%c23] : memref<53xf32, #tpu.memory_space<smem>>
    %112 = vector.broadcast %111 : f32 to vector<2x8xf32>
    %113 = arith.mulf %112, %19 : vector<2x8xf32>
    %114 = arith.addf %110, %113 : vector<2x8xf32>
    %c24 = arith.constant 24 : index
    %115 = memref.load %arg2[%c24] : memref<53xf32, #tpu.memory_space<smem>>
    %116 = vector.broadcast %115 : f32 to vector<2x8xf32>
    %117 = arith.mulf %116, %16 : vector<2x8xf32>
    %c25 = arith.constant 25 : index
    %118 = memref.load %arg2[%c25] : memref<53xf32, #tpu.memory_space<smem>>
    %119 = vector.broadcast %118 : f32 to vector<2x8xf32>
    %120 = arith.mulf %119, %17 : vector<2x8xf32>
    %121 = arith.addf %117, %120 : vector<2x8xf32>
    %c26 = arith.constant 26 : index
    %122 = memref.load %arg2[%c26] : memref<53xf32, #tpu.memory_space<smem>>
    %123 = vector.broadcast %122 : f32 to vector<2x8xf32>
    %124 = arith.mulf %123, %18 : vector<2x8xf32>
    %125 = arith.addf %121, %124 : vector<2x8xf32>
    %c27 = arith.constant 27 : index
    %126 = memref.load %arg2[%c27] : memref<53xf32, #tpu.memory_space<smem>>
    %127 = vector.broadcast %126 : f32 to vector<2x8xf32>
    %128 = arith.mulf %127, %19 : vector<2x8xf32>
    %129 = arith.addf %125, %128 : vector<2x8xf32>
    %c28 = arith.constant 28 : index
    %130 = memref.load %arg2[%c28] : memref<53xf32, #tpu.memory_space<smem>>
    %131 = vector.broadcast %130 : f32 to vector<2x8xf32>
    %132 = arith.mulf %131, %16 : vector<2x8xf32>
    %c29 = arith.constant 29 : index
    %133 = memref.load %arg2[%c29] : memref<53xf32, #tpu.memory_space<smem>>
    %134 = vector.broadcast %133 : f32 to vector<2x8xf32>
    %135 = arith.mulf %134, %17 : vector<2x8xf32>
    %136 = arith.addf %132, %135 : vector<2x8xf32>
    %c30 = arith.constant 30 : index
    %137 = memref.load %arg2[%c30] : memref<53xf32, #tpu.memory_space<smem>>
    %138 = vector.broadcast %137 : f32 to vector<2x8xf32>
    %139 = arith.mulf %138, %18 : vector<2x8xf32>
    %140 = arith.addf %136, %139 : vector<2x8xf32>
    %c31 = arith.constant 31 : index
    %141 = memref.load %arg2[%c31] : memref<53xf32, #tpu.memory_space<smem>>
    %142 = vector.broadcast %141 : f32 to vector<2x8xf32>
    %143 = arith.mulf %142, %19 : vector<2x8xf32>
    %144 = arith.addf %140, %143 : vector<2x8xf32>
    %145 = vector.shape_cast %22 : vector<1x8xi1> to vector<1x8xi1>
    %146 = vector.broadcast %145 : vector<1x8xi1> to vector<2x8xi1>
    %147 = arith.select %146, %12, %39 : vector<2x8xi1>, vector<2x8xf32>
    %148 = vector.shape_cast %22 : vector<1x8xi1> to vector<1x8xi1>
    %149 = vector.broadcast %148 : vector<1x8xi1> to vector<2x8xi1>
    %150 = arith.select %149, %13, %54 : vector<2x8xi1>, vector<2x8xf32>
    %151 = vector.shape_cast %22 : vector<1x8xi1> to vector<1x8xi1>
    %152 = vector.broadcast %151 : vector<1x8xi1> to vector<2x8xi1>
    %153 = arith.select %152, %14, %69 : vector<2x8xi1>, vector<2x8xf32>
    %154 = vector.shape_cast %22 : vector<1x8xi1> to vector<1x8xi1>
    %155 = vector.broadcast %154 : vector<1x8xi1> to vector<2x8xi1>
    %156 = arith.select %155, %15, %84 : vector<2x8xi1>, vector<2x8xf32>
    %157 = vector.shape_cast %24 : vector<1x8xi1> to vector<1x8xi1>
    %158 = vector.broadcast %157 : vector<1x8xi1> to vector<2x8xi1>
    %159 = arith.select %158, %12, %99 : vector<2x8xi1>, vector<2x8xf32>
    %160 = vector.shape_cast %24 : vector<1x8xi1> to vector<1x8xi1>
    %161 = vector.broadcast %160 : vector<1x8xi1> to vector<2x8xi1>
    %162 = arith.select %161, %13, %114 : vector<2x8xi1>, vector<2x8xf32>
    %163 = vector.shape_cast %24 : vector<1x8xi1> to vector<1x8xi1>
    %164 = vector.broadcast %163 : vector<1x8xi1> to vector<2x8xi1>
    %165 = arith.select %164, %14, %129 : vector<2x8xi1>, vector<2x8xf32>
    %166 = vector.shape_cast %24 : vector<1x8xi1> to vector<1x8xi1>
    %167 = vector.broadcast %166 : vector<1x8xi1> to vector<2x8xi1>
    %168 = arith.select %167, %15, %144 : vector<2x8xi1>, vector<2x8xf32>
    %c44 = arith.constant 44 : index
    %169 = memref.load %arg2[%c44] : memref<53xf32, #tpu.memory_space<smem>>
    %c32 = arith.constant 32 : index
    %170 = memref.load %arg2[%c32] : memref<53xf32, #tpu.memory_space<smem>>
    %171 = vector.broadcast %170 : f32 to vector<2x8xf32>
    %172 = arith.mulf %171, %147 : vector<2x8xf32>
    %173 = vector.broadcast %169 : f32 to vector<2x8xf32>
    %174 = arith.addf %173, %172 : vector<2x8xf32>
    %c36 = arith.constant 36 : index
    %175 = memref.load %arg2[%c36] : memref<53xf32, #tpu.memory_space<smem>>
    %176 = vector.broadcast %175 : f32 to vector<2x8xf32>
    %177 = arith.mulf %176, %159 : vector<2x8xf32>
    %178 = arith.addf %174, %177 : vector<2x8xf32>
    %c33 = arith.constant 33 : index
    %179 = memref.load %arg2[%c33] : memref<53xf32, #tpu.memory_space<smem>>
    %180 = vector.broadcast %179 : f32 to vector<2x8xf32>
    %181 = arith.mulf %180, %150 : vector<2x8xf32>
    %182 = arith.addf %178, %181 : vector<2x8xf32>
    %c37 = arith.constant 37 : index
    %183 = memref.load %arg2[%c37] : memref<53xf32, #tpu.memory_space<smem>>
    %184 = vector.broadcast %183 : f32 to vector<2x8xf32>
    %185 = arith.mulf %184, %162 : vector<2x8xf32>
    %186 = arith.addf %182, %185 : vector<2x8xf32>
    %c34 = arith.constant 34 : index
    %187 = memref.load %arg2[%c34] : memref<53xf32, #tpu.memory_space<smem>>
    %188 = vector.broadcast %187 : f32 to vector<2x8xf32>
    %189 = arith.mulf %188, %153 : vector<2x8xf32>
    %190 = arith.addf %186, %189 : vector<2x8xf32>
    %c38 = arith.constant 38 : index
    %191 = memref.load %arg2[%c38] : memref<53xf32, #tpu.memory_space<smem>>
    %192 = vector.broadcast %191 : f32 to vector<2x8xf32>
    %193 = arith.mulf %192, %165 : vector<2x8xf32>
    %194 = arith.addf %190, %193 : vector<2x8xf32>
    %c35 = arith.constant 35 : index
    %195 = memref.load %arg2[%c35] : memref<53xf32, #tpu.memory_space<smem>>
    %196 = vector.broadcast %195 : f32 to vector<2x8xf32>
    %197 = arith.mulf %196, %156 : vector<2x8xf32>
    %198 = arith.addf %194, %197 : vector<2x8xf32>
    %c39 = arith.constant 39 : index
    %199 = memref.load %arg2[%c39] : memref<53xf32, #tpu.memory_space<smem>>
    %200 = vector.broadcast %199 : f32 to vector<2x8xf32>
    %201 = arith.mulf %200, %168 : vector<2x8xf32>
    %202 = arith.addf %198, %201 : vector<2x8xf32>
    %cst = arith.constant 5.000000e-01 : f32
    %203 = vector.broadcast %cst : f32 to vector<2x8xf32>
    %204 = arith.mulf %203, %202 : vector<2x8xf32>
    %205 = math.tanh %204 : vector<2x8xf32>
    %cst_12 = arith.constant 5.000000e-01 : f32
    %206 = vector.broadcast %cst_12 : f32 to vector<2x8xf32>
    %207 = arith.mulf %206, %205 : vector<2x8xf32>
    %cst_13 = arith.constant 5.000000e-01 : f32
    %208 = vector.broadcast %cst_13 : f32 to vector<2x8xf32>
    %209 = arith.addf %207, %208 : vector<2x8xf32>
    %cst_14 = arith.constant 1.000000e+00 : f32
    %210 = vector.broadcast %cst_14 : f32 to vector<2x8xf32>
    %211 = arith.subf %210, %209 : vector<2x8xf32>
    %212 = arith.addf %147, %159 : vector<2x8xf32>
    %213 = arith.mulf %209, %212 : vector<2x8xf32>
    %214 = arith.mulf %211, %12 : vector<2x8xf32>
    %215 = arith.addf %213, %214 : vector<2x8xf32>
    %c40 = arith.constant 40 : index
    %216 = memref.load %arg2[%c40] : memref<53xf32, #tpu.memory_space<smem>>
    %217 = vector.broadcast %216 : f32 to vector<2x8xf32>
    %218 = arith.mulf %217, %215 : vector<2x8xf32>
    %219 = arith.addf %150, %162 : vector<2x8xf32>
    %220 = arith.mulf %209, %219 : vector<2x8xf32>
    %221 = arith.mulf %211, %13 : vector<2x8xf32>
    %222 = arith.addf %220, %221 : vector<2x8xf32>
    %c41 = arith.constant 41 : index
    %223 = memref.load %arg2[%c41] : memref<53xf32, #tpu.memory_space<smem>>
    %224 = vector.broadcast %223 : f32 to vector<2x8xf32>
    %225 = arith.mulf %224, %222 : vector<2x8xf32>
    %226 = arith.addf %218, %225 : vector<2x8xf32>
    %227 = arith.addf %153, %165 : vector<2x8xf32>
    %228 = arith.mulf %209, %227 : vector<2x8xf32>
    %229 = arith.mulf %211, %14 : vector<2x8xf32>
    %230 = arith.addf %228, %229 : vector<2x8xf32>
    %c42 = arith.constant 42 : index
    %231 = memref.load %arg2[%c42] : memref<53xf32, #tpu.memory_space<smem>>
    %232 = vector.broadcast %231 : f32 to vector<2x8xf32>
    %233 = arith.mulf %232, %230 : vector<2x8xf32>
    %234 = arith.addf %226, %233 : vector<2x8xf32>
    %235 = arith.addf %156, %168 : vector<2x8xf32>
    %236 = arith.mulf %209, %235 : vector<2x8xf32>
    %237 = arith.mulf %211, %15 : vector<2x8xf32>
    %238 = arith.addf %236, %237 : vector<2x8xf32>
    %c43 = arith.constant 43 : index
    %239 = memref.load %arg2[%c43] : memref<53xf32, #tpu.memory_space<smem>>
    %240 = vector.broadcast %239 : f32 to vector<2x8xf32>
    %241 = arith.mulf %240, %238 : vector<2x8xf32>
    %242 = arith.addf %234, %241 : vector<2x8xf32>
    %cst_15 = arith.constant 5.000000e-01 : f32
    %243 = vector.broadcast %cst_15 : f32 to vector<2x8xf32>
    %244 = arith.mulf %243, %242 : vector<2x8xf32>
    %245 = math.tanh %244 : vector<2x8xf32>
    %cst_16 = arith.constant 5.000000e-01 : f32
    %246 = vector.broadcast %cst_16 : f32 to vector<2x8xf32>
    %247 = arith.mulf %246, %245 : vector<2x8xf32>
    %cst_17 = arith.constant 5.000000e-01 : f32
    %248 = vector.broadcast %cst_17 : f32 to vector<2x8xf32>
    %249 = arith.addf %247, %248 : vector<2x8xf32>
    %cst_18 = arith.constant 1.000000e-07 : f32
    %cst_19 = arith.constant 0.99999988 : f32
    %250 = vector.broadcast %cst_18 : f32 to vector<2x8xf32>
    %251 = arith.maximumf %250, %249 : vector<2x8xf32>
    %252 = vector.broadcast %cst_19 : f32 to vector<2x8xf32>
    %253 = arith.minimumf %252, %251 : vector<2x8xf32>
    %254 = math.log %253 : vector<2x8xf32>
    %cst_20 = arith.constant dense<0.000000e+00> : vector<2xf32>
    %255 = vector.multi_reduction <add>, %254, %cst_20 [1] : vector<2x8xf32> to vector<2xf32>
    %256 = vector.shape_cast %255 : vector<2xf32> to vector<2x1xf32>
    %cst_21 = arith.constant 1.000000e+00 : f32
    %257 = vector.broadcast %cst_21 : f32 to vector<2x8xf32>
    %258 = arith.subf %257, %253 : vector<2x8xf32>
    %259 = math.log %258 : vector<2x8xf32>
    %cst_22 = arith.constant dense<0.000000e+00> : vector<2xf32>
    %260 = vector.multi_reduction <add>, %259, %cst_22 [1] : vector<2x8xf32> to vector<2xf32>
    %261 = vector.shape_cast %260 : vector<2xf32> to vector<2x1xf32>
    %cst_23 = arith.constant dense<0.000000e+00> : vector<2xf32>
    %262 = vector.multi_reduction <add>, %249, %cst_23 [1] : vector<2x8xf32> to vector<2xf32>
    %263 = vector.shape_cast %262 : vector<2xf32> to vector<2x1xf32>
    %c45 = arith.constant 45 : index
    %264 = memref.load %arg2[%c45] : memref<53xf32, #tpu.memory_space<smem>>
    %c46 = arith.constant 46 : index
    %265 = memref.load %arg2[%c46] : memref<53xf32, #tpu.memory_space<smem>>
    %c47 = arith.constant 47 : index
    %266 = memref.load %arg2[%c47] : memref<53xf32, #tpu.memory_space<smem>>
    %c48 = arith.constant 48 : index
    %267 = memref.load %arg2[%c48] : memref<53xf32, #tpu.memory_space<smem>>
    %c49 = arith.constant 49 : index
    %268 = memref.load %arg2[%c49] : memref<53xf32, #tpu.memory_space<smem>>
    %c50 = arith.constant 50 : index
    %269 = memref.load %arg2[%c50] : memref<53xf32, #tpu.memory_space<smem>>
    %c51 = arith.constant 51 : index
    %270 = memref.load %arg2[%c51] : memref<53xf32, #tpu.memory_space<smem>>
    %c52 = arith.constant 52 : index
    %271 = memref.load %arg2[%c52] : memref<53xf32, #tpu.memory_space<smem>>
    %cst_24 = arith.constant 1.000000e+00 : f32
    %272 = arith.subf %264, %cst_24 : f32
    %273 = vector.broadcast %272 : f32 to vector<2x1xf32>
    %274 = arith.mulf %273, %256 : vector<2x1xf32>
    %cst_25 = arith.constant 1.000000e+00 : f32
    %275 = arith.subf %265, %cst_25 : f32
    %276 = vector.broadcast %275 : f32 to vector<2x1xf32>
    %277 = arith.mulf %276, %261 : vector<2x1xf32>
    %278 = arith.addf %274, %277 : vector<2x1xf32>
    %cst_26 = arith.constant 8.000000e+00 : f32
    %279 = arith.mulf %cst_26, %268 : f32
    %280 = vector.broadcast %279 : f32 to vector<2x1xf32>
    %281 = arith.subf %278, %280 : vector<2x1xf32>
    %cst_27 = arith.constant 1.000000e+00 : f32
    %282 = arith.subf %266, %cst_27 : f32
    %283 = vector.broadcast %282 : f32 to vector<2x1xf32>
    %284 = arith.mulf %283, %256 : vector<2x1xf32>
    %cst_28 = arith.constant 1.000000e+00 : f32
    %285 = arith.subf %267, %cst_28 : f32
    %286 = vector.broadcast %285 : f32 to vector<2x1xf32>
    %287 = arith.mulf %286, %261 : vector<2x1xf32>
    %288 = arith.addf %284, %287 : vector<2x1xf32>
    %cst_29 = arith.constant 8.000000e+00 : f32
    %289 = arith.mulf %cst_29, %269 : f32
    %290 = vector.broadcast %289 : f32 to vector<2x1xf32>
    %291 = arith.subf %288, %290 : vector<2x1xf32>
    %292 = vector.broadcast %271 : f32 to vector<2x1xf32>
    %293 = arith.addf %291, %292 : vector<2x1xf32>
    %294 = vector.broadcast %270 : f32 to vector<2x1xf32>
    %295 = arith.addf %281, %294 : vector<2x1xf32>
    %296 = arith.maximumf %293, %295 : vector<2x1xf32>
    %297 = arith.subf %293, %296 : vector<2x1xf32>
    %298 = math.exp %297 : vector<2x1xf32>
    %299 = arith.subf %295, %296 : vector<2x1xf32>
    %300 = math.exp %299 : vector<2x1xf32>
    %301 = arith.addf %298, %300 : vector<2x1xf32>
    %302 = math.log %301 : vector<2x1xf32>
    %303 = arith.addf %296, %302 : vector<2x1xf32>
    %304 = arith.subf %293, %303 : vector<2x1xf32>
    %305 = math.exp %304 : vector<2x1xf32>
    %c0_30 = arith.constant 0 : index
    %c0_31 = arith.constant 0 : index
    %306 = vector.load %arg3[%c0_30, %c0_31] : memref<2x2xf32, #tpu.memory_space<vmem>>, vector<2x1xf32>
    tpu.vector_store %arg3[%c0_30, %c0_31], %305 {strides = array<i32>} : memref<2x2xf32, #tpu.memory_space<vmem>>, vector<2x1xf32>,
    %cst_32 = arith.constant 1.250000e-01 : f32
    %307 = vector.broadcast %cst_32 : f32 to vector<2x1xf32>
    %308 = arith.mulf %263, %307 : vector<2x1xf32>
    %c0_33 = arith.constant 0 : index
    %c1_34 = arith.constant 1 : index
    %309 = vector.load %arg3[%c0_33, %c1_34] : memref<2x2xf32, #tpu.memory_space<vmem>>, vector<2x1xf32>
    tpu.vector_store %arg3[%c0_33, %c1_34], %308 {strides = array<i32>} : memref<2x2xf32, #tpu.memory_space<vmem>>, vector<2x1xf32>,
    return
  }
  func.func @transform_0(%arg0: i32) -> (i32, i32, i32) {
    %c0_i32 = arith.constant 0 : i32
    %c0_i32_0 = arith.constant 0 : i32
    %c0_i32_1 = arith.constant 0 : i32
    return %c0_i32, %arg0, %c0_i32_0 : i32, i32, i32
  }
  func.func @transform_1(%arg0: i32) -> i32 {
    %c0_i32 = arith.constant 0 : i32
    %c0_i32_0 = arith.constant 0 : i32
    return %c0_i32 : i32
  }
  func.func @transform_2(%arg0: i32) -> (i32, i32) {
    %c0_i32 = arith.constant 0 : i32
    %c0_i32_0 = arith.constant 0 : i32
    return %arg0, %c0_i32 : i32, i32
  }
}

</mosaic_0001>

<llo_original>
// kernel: tpu_custom_call.1
$region0: #{tpu_custom_call.1}
  #allocation0 [shape = 'u32[]', space=smem, size = 0x4, offset = 0x4, fixed_abs, tag = 'smem constant byte address 0x4 - core index']
  #allocation1 [shape = 'u32[144,128]{1,0:T(1,128)}', space=vmem, size = 0x12000, scoped, tag = 'internal scratch']
  %s0 = inlined_call_operand.hbm [shape: bf16[4,2,9], index: 0, kind: input, shape index: {}]
  %s1 = inlined_call_operand.vmem [shape: f32[53], index: 1, kind: input, shape index: {}]
  %s2 = inlined_call_operand.hbm [shape: f32[2,2], index: 2, kind: output, shape index: {}]
  %s3 = sld [smem:[#allocation0]]
  $region26: #{tpu_custom_call.1} parent=0
    _
  %s5 = ssub.s32 1, %s3
  %s6 = scalar_select 0, %s5, %s3
  $region1: #{tpu_custom_call.1} parent=0
    #allocation2 [shape = 'u8[2048]{0}', space=vmem, size = 0x800, scoped, tag = 'input window, operand 0, single buffered']
    #allocation3 [shape = 's32[1]{0}', space=sflag, size = 0x4, scoped, tag = 'scoped memory for tpu_custom_call.1']
    #allocation4 [shape = 's32[1]{0}', space=sflag, size = 0x4, scoped, tag = 'scoped memory for tpu_custom_call.1']
    #allocation5 [shape = 's32[1]{0}', space=sflag, size = 0x4, scoped, tag = 'scoped memory for tpu_custom_call.1']
    #allocation6 [shape = 'u8[512]{0}', space=smem, size = 0x200, scoped, tag = 'input window, operand 1, single buffered']
    #allocation7 [shape = 'u8[1024]{0}', space=vmem, size = 0x400, scoped, tag = 'output window, operand 0, single buffered']
    %7 = vsyncpa [#allocation3], 0
    %8 = vsyncpa [#allocation5], 0
    %9 = vsyncpa [#allocation4], 0
    // Predicated region
    $region2: #{tpu_custom_call.1} parent=1 // pred_check
      _
    $region3: #{tpu_custom_call.1} parent=1 // pred_check_branch
      %11 = sbr.rel (0) target = $region5
    $region4: #{tpu_custom_call.1} parent=1 // pred_region
      %s13 = ssub.s32 64, 64
      %14 = vsyncadd [#allocation3], %s13
      %s15 = sshll.u32 [#allocation2], 4
      %s16 = int_to_ptr.vmem [resolvable:$true] %s15
      %21 = dma.hbm_to_vmem [thread:$0]  %s0, 64, %s16, [#allocation3], 16, 16, 1
    $region5: #{tpu_custom_call.1} parent=1 // pred_fallthru
      _
    // Predicated region
    $region6: #{tpu_custom_call.1} parent=1 // pred_check
      _
    $region7: #{tpu_custom_call.1} parent=1 // pred_check_branch
      %23 = sbr.rel (0) target = $region9
    $region8: #{tpu_custom_call.1} parent=1 // pred_region
      %s25 = ssub.s32 16, 16
      %26 = vsyncadd [#allocation5], %s25
      %s28 = sshll.u32 %s1, 4
      %s29 = int_to_ptr.vmem [resolvable:$true] %s28
      %31 = dma.vmem_to_smem %s29, 16, [#allocation6], [#allocation5]
    $region9: #{tpu_custom_call.1} parent=1 // pred_fallthru
      _
    // Predicated region
    $region10: #{tpu_custom_call.1} parent=1 // pred_check
      _
    $region11: #{tpu_custom_call.1} parent=1 // pred_check_branch
      %33 = sbr.rel (0) target = $region13
    $region12: #{tpu_custom_call.1} parent=1 // pred_region
      %34 = dma.done [#allocation3], 64
    $region13: #{tpu_custom_call.1} parent=1 // pred_fallthru
      _
    // Predicated region
    $region14: #{tpu_custom_call.1} parent=1 // pred_check
      _
    $region15: #{tpu_custom_call.1} parent=1 // pred_check_branch
      %36 = sbr.rel (0) target = $region17
    $region16: #{tpu_custom_call.1} parent=1 // pred_region
      %37 = dma.done [#allocation5], 16
    $region17: #{tpu_custom_call.1} parent=1 // pred_fallthru
      _
    %38 = sfence
    %v39 = vld [vmem:[#allocation2] sm:$0x1]
    %v40 = vunpack.c.l.bf16 %v39
    %s41 = scalar_lea.vmem [#allocation2], 1
    %v42 = vld [vmem:[%s41] sm:$0x1]
    %v43 = vunpack.c.l.bf16 %v42
    %s44 = scalar_lea.vmem [#allocation2], 2
    %v45 = vld [vmem:[%s44] sm:$0x1]
    %v46 = vunpack.c.l.bf16 %v45
    %s47 = scalar_lea.vmem [#allocation2], 3
    %v48 = vld [vmem:[%s47] sm:$0x1]
    %v49 = vunpack.c.l.bf16 %v48
    %v50 = vlaneseq
    %v51 = vand.u32 %v50, 127
    %vm52 = vcmp.eq.s32.totalorder %v51, 0
    %vm53 = vcmp.eq.s32.totalorder %v51, 7
    %s54 = sld [smem:[#allocation6]]
    %v55 = vstv %s54
    %v56 = vmul.f32 %v55, %v40
    %s57 = sld [smem:[#allocation6 + $0x1]]
    %v58 = vstv %s57
    %v59 = vmul.f32 %v58, %v43
    %v60 = vadd.f32 %v56, %v59
    %s61 = sld [smem:[#allocation6 + $0x2]]
    %v62 = vstv %s61
    %v63 = vmul.f32 %v62, %v46
    %v64 = vadd.f32 %v60, %v63
    %s65 = sld [smem:[#allocation6 + $0x3]]
    %v66 = vstv %s65
    %v67 = vmul.f32 %v66, %v49
    %v68 = vadd.f32 %v64, %v67
    %s69 = sld [smem:[#allocation6 + $0x4]]
    %v70 = vstv %s69
    %v71 = vmul.f32 %v70, %v40
    %s72 = sld [smem:[#allocation6 + $0x5]]
    %v73 = vstv %s72
    %v74 = vmul.f32 %v73, %v43
    %v75 = vadd.f32 %v71, %v74
    %s76 = sld [smem:[#allocation6 + $0x6]]
    %v77 = vstv %s76
    %v78 = vmul.f32 %v77, %v46
    %v79 = vadd.f32 %v75, %v78
    %s80 = sld [smem:[#allocation6 + $0x7]]
    %v81 = vstv %s80
    %v82 = vmul.f32 %v81, %v49
    %v83 = vadd.f32 %v79, %v82
    %s84 = sld [smem:[#allocation6 + $0x8]]
    %v85 = vstv %s84
    %v86 = vmul.f32 %v85, %v40
    %s87 = sld [smem:[#allocation6 + $0x9]]
    %v88 = vstv %s87
    %v89 = vmul.f32 %v88, %v43
    %v90 = vadd.f32 %v86, %v89
    %s91 = sld [smem:[#allocation6 + $0xa]]
    %v92 = vstv %s91
    %v93 = vmul.f32 %v92, %v46
    %v94 = vadd.f32 %v90, %v93
    %s95 = sld [smem:[#allocation6 + $0xb]]
    %v96 = vstv %s95
    %v97 = vmul.f32 %v96, %v49
    %v98 = vadd.f32 %v94, %v97
    %s99 = sld [smem:[#allocation6 + $0xc]]
    %v100 = vstv %s99
    %v101 = vmul.f32 %v100, %v40
    %s102 = sld [smem:[#allocation6 + $0xd]]
    %v103 = vstv %s102
    %v104 = vmul.f32 %v103, %v43
    %v105 = vadd.f32 %v101, %v104
    %s106 = sld [smem:[#allocation6 + $0xe]]
    %v107 = vstv %s106
    %v108 = vmul.f32 %v107, %v46
    %v109 = vadd.f32 %v105, %v108
    %s110 = sld [smem:[#allocation6 + $0xf]]
    %v111 = vstv %s110
    %v112 = vmul.f32 %v111, %v49
    %v113 = vadd.f32 %v109, %v112
    %s114 = sld [smem:[#allocation6 + $0x10]]
    %v115 = vstv %s114
    %v116 = vmul.f32 %v115, %v40
    %s117 = sld [smem:[#allocation6 + $0x11]]
    %v118 = vstv %s117
    %v119 = vmul.f32 %v118, %v43
    %v120 = vadd.f32 %v116, %v119
    %s121 = sld [smem:[#allocation6 + $0x12]]
    %v122 = vstv %s121
    %v123 = vmul.f32 %v122, %v46
    %v124 = vadd.f32 %v120, %v123
    %s125 = sld [smem:[#allocation6 + $0x13]]
    %v126 = vstv %s125
    %v127 = vmul.f32 %v126, %v49
    %v128 = vadd.f32 %v124, %v127
    %s129 = sld [smem:[#allocation6 + $0x14]]
    %v130 = vstv %s129
    %v131 = vmul.f32 %v130, %v40
    %s132 = sld [smem:[#allocation6 + $0x15]]
    %v133 = vstv %s132
    %v134 = vmul.f32 %v133, %v43
    %v135 = vadd.f32 %v131, %v134
    %s136 = sld [smem:[#allocation6 + $0x16]]
    %v137 = vstv %s136
    %v138 = vmul.f32 %v137, %v46
    %v139 = vadd.f32 %v135, %v138
    %s140 = sld [smem:[#allocation6 + $0x17]]
    %v141 = vstv %s140
    %v142 = vmul.f32 %v141, %v49
    %v143 = vadd.f32 %v139, %v142
    %s144 = sld [smem:[#allocation6 + $0x18]]
    %v145 = vstv %s144
    %v146 = vmul.f32 %v145, %v40
    %s147 = sld [smem:[#allocation6 + $0x19]]
    %v148 = vstv %s147
    %v149 = vmul.f32 %v148, %v43
    %v150 = vadd.f32 %v146, %v149
    %s151 = sld [smem:[#allocation6 + $0x1a]]
    %v152 = vstv %s151
    %v153 = vmul.f32 %v152, %v46
    %v154 = vadd.f32 %v150, %v153
    %s155 = sld [smem:[#allocation6 + $0x1b]]
    %v156 = vstv %s155
    %v157 = vmul.f32 %v156, %v49
    %v158 = vadd.f32 %v154, %v157
    %s159 = sld [smem:[#allocation6 + $0x1c]]
    %v160 = vstv %s159
    %v161 = vmul.f32 %v160, %v40
    %s162 = sld [smem:[#allocation6 + $0x1d]]
    %v163 = vstv %s162
    %v164 = vmul.f32 %v163, %v43
    %v165 = vadd.f32 %v161, %v164
    %s166 = sld [smem:[#allocation6 + $0x1e]]
    %v167 = vstv %s166
    %v168 = vmul.f32 %v167, %v46
    %v169 = vadd.f32 %v165, %v168
    %s170 = sld [smem:[#allocation6 + $0x1f]]
    %v171 = vstv %s170
    %v172 = vmul.f32 %v171, %v49
    %v173 = vadd.f32 %v169, %v172
    %v174 = vsel %vm52, 1, 0
    %vm175 = vcmp.eq.s32.totalorder %v174, 1
    %v176 = vsel %vm175, %v40, %v68
    %v177 = vsel %vm175, %v43, %v83
    %v178 = vsel %vm175, %v46, %v98
    %v179 = vsel %vm175, %v49, %v113
    %v180 = vsel %vm53, 1, 0
    %vm181 = vcmp.eq.s32.totalorder %v180, 1
    %v184 = vunpack.c.l.s4 1983009808
    %v185 = vunpack.c.0.s8 %v184
    %v186 = vlaneseq
    %v187 = vshrl.u32 %v186, 7
    %v188 = vsub.s32 %v185, %v187
    %v189 = vrot.slane %v128, %v188
    %190 = vrot.lane.b32.xlu0 %v189, 127
    %v191 = vpop.permute.xlu0 %190
    %v193 = vsel %vm181, %v40, %v191
    %v196 = vunpack.c.l.s4 1983009808
    %v197 = vunpack.c.0.s8 %v196
    %v198 = vlaneseq
    %v199 = vshrl.u32 %v198, 7
    %v200 = vsub.s32 %v197, %v199
    %v201 = vrot.slane %v143, %v200
    %202 = vrot.lane.b32.xlu0 %v201, 127
    %v203 = vpop.permute.xlu0 %202
    %v205 = vsel %vm181, %v43, %v203
    %v208 = vunpack.c.l.s4 1983009808
    %v209 = vunpack.c.0.s8 %v208
    %v210 = vlaneseq
    %v211 = vshrl.u32 %v210, 7
    %v212 = vsub.s32 %v209, %v211
    %v213 = vrot.slane %v158, %v212
    %214 = vrot.lane.b32.xlu0 %v213, 127
    %v215 = vpop.permute.xlu0 %214
    %v217 = vsel %vm181, %v46, %v215
    %v220 = vunpack.c.l.s4 1983009808
    %v221 = vunpack.c.0.s8 %v220
    %v222 = vlaneseq
    %v223 = vshrl.u32 %v222, 7
    %v224 = vsub.s32 %v221, %v223
    %v225 = vrot.slane %v173, %v224
    %226 = vrot.lane.b32.xlu0 %v225, 127
    %v227 = vpop.permute.xlu0 %226
    %v229 = vsel %vm181, %v49, %v227
    %s230 = sld [smem:[#allocation6 + $0x2c]]
    %s231 = sld [smem:[#allocation6 + $0x20]]
    %v232 = vstv %s231
    %v233 = vmul.f32 %v232, %v176
    %v234 = vstv %s230
    %v235 = vadd.f32 %v234, %v233
    %s236 = sld [smem:[#allocation6 + $0x24]]
    %v237 = vstv %s236
    %v238 = vmul.f32 %v237, %v193
    %v239 = vadd.f32 %v235, %v238
    %s240 = sld [smem:[#allocation6 + $0x21]]
    %v241 = vstv %s240
    %v242 = vmul.f32 %v241, %v177
    %v243 = vadd.f32 %v239, %v242
    %s244 = sld [smem:[#allocation6 + $0x25]]
    %v245 = vstv %s244
    %v246 = vmul.f32 %v245, %v205
    %v247 = vadd.f32 %v243, %v246
    %s248 = sld [smem:[#allocation6 + $0x22]]
    %v249 = vstv %s248
    %v250 = vmul.f32 %v249, %v178
    %v251 = vadd.f32 %v247, %v250
    %s252 = sld [smem:[#allocation6 + $0x26]]
    %v253 = vstv %s252
    %v254 = vmul.f32 %v253, %v217
    %v255 = vadd.f32 %v251, %v254
    %s256 = sld [smem:[#allocation6 + $0x23]]
    %v257 = vstv %s256
    %v258 = vmul.f32 %v257, %v179
    %v259 = vadd.f32 %v255, %v258
    %s260 = sld [smem:[#allocation6 + $0x27]]
    %v261 = vstv %s260
    %v262 = vmul.f32 %v261, %v229
    %v263 = vadd.f32 %v259, %v262
    %v264 = vmul.f32 %v263, 0.5
    %v265 = vtanh.pop %v264
    %v266 = vmul.f32 %v265, 0.5
    %v267 = vadd.f32 %v266, 0.5
    %v268 = vsub.f32 1.0, %v267
    %v269 = vadd.f32 %v176, %v193
    %v270 = vmul.f32 %v267, %v269
    %v271 = vmul.f32 %v268, %v40
    %v272 = vadd.f32 %v270, %v271
    %s273 = sld [smem:[#allocation6 + $0x28]]
    %v274 = vstv %s273
    %v275 = vmul.f32 %v274, %v272
    %v276 = vadd.f32 %v177, %v205
    %v277 = vmul.f32 %v267, %v276
    %v278 = vmul.f32 %v268, %v43
    %v279 = vadd.f32 %v277, %v278
    %s280 = sld [smem:[#allocation6 + $0x29]]
    %v281 = vstv %s280
    %v282 = vmul.f32 %v281, %v279
    %v283 = vadd.f32 %v275, %v282
    %v284 = vadd.f32 %v178, %v217
    %v285 = vmul.f32 %v267, %v284
    %v286 = vmul.f32 %v268, %v46
    %v287 = vadd.f32 %v285, %v286
    %s288 = sld [smem:[#allocation6 + $0x2a]]
    %v289 = vstv %s288
    %v290 = vmul.f32 %v289, %v287
    %v291 = vadd.f32 %v283, %v290
    %v292 = vadd.f32 %v179, %v229
    %v293 = vmul.f32 %v267, %v292
    %v294 = vmul.f32 %v268, %v49
    %v295 = vadd.f32 %v293, %v294
    %s296 = sld [smem:[#allocation6 + $0x2b]]
    %v297 = vstv %s296
    %v298 = vmul.f32 %v297, %v295
    %v299 = vadd.f32 %v291, %v298
    %v300 = vmul.f32 %v299, 0.5
    %v301 = vtanh.pop %v300
    %v302 = vmul.f32 %v301, 0.5
    %v303 = vadd.f32 %v302, 0.5
    %v304 = vmax.f32 %v303, 1e-07
    %v305 = vmin.f32 %v304, 0.9999999
    %v306 = vlog2.pop %v305
    %v307 = vmul.f32 %v306, 0.6931472
    %vm308 = vcmask 58368
    %v309 = vsel %vm308, %v307, 0.0
    %310 = vadd.xlane.f32.xlu0 %v309
    %v311 = vpop.xlane.xlu0 %310
    %v312 = vsub.f32 1.0, %v305
    %v313 = vlog2.pop %v312
    %v314 = vmul.f32 %v313, 0.6931472
    %v315 = vsel %vm308, %v314, 0.0
    %316 = vadd.xlane.f32.xlu0 %v315
    %v317 = vpop.xlane.xlu0 %316
    %v318 = vsel %vm308, %v303, 0.0
    %319 = vadd.xlane.f32.xlu0 %v318
    %v320 = vpop.xlane.xlu0 %319
    %s321 = sld [smem:[#allocation6 + $0x2d]]
    %s322 = sld [smem:[#allocation6 + $0x2e]]
    %s323 = sld [smem:[#allocation6 + $0x2f]]
    %s324 = sld [smem:[#allocation6 + $0x30]]
    %s325 = sld [smem:[#allocation6 + $0x31]]
    %s326 = sld [smem:[#allocation6 + $0x32]]
    %s327 = sld [smem:[#allocation6 + $0x33]]
    %s328 = sld [smem:[#allocation6 + $0x34]]
    %s329 = ssub.f32 %s321, 1.0
    %v330 = vstv %s329
    %v331 = vmul.f32 %v330, %v311
    %s332 = ssub.f32 %s322, 1.0
    %v333 = vstv %s332
    %v334 = vmul.f32 %v333, %v317
    %v335 = vadd.f32 %v331, %v334
    %s336 = smul.f32 %s325, 8.0
    %v337 = vstv %s336
    %v338 = vsub.f32 %v335, %v337
    %s339 = ssub.f32 %s323, 1.0
    %v340 = vstv %s339
    %v341 = vmul.f32 %v340, %v311
    %s342 = ssub.f32 %s324, 1.0
    %v343 = vstv %s342
    %v344 = vmul.f32 %v343, %v317
    %v345 = vadd.f32 %v341, %v344
    %s346 = smul.f32 %s326, 8.0
    %v347 = vstv %s346
    %v348 = vsub.f32 %v345, %v347
    %v349 = vstv %s328
    %v350 = vadd.f32 %v348, %v349
    %v351 = vstv %s327
    %v352 = vadd.f32 %v338, %v351
    %v353 = vmax.f32 %v350, %v352
    %v354 = vsub.f32 %v350, %v353
    %v355 = vmul.f32 %v354, 1.442695
    %v356 = vpow.pop %v355
    %v357 = vsub.f32 %v352, %v353
    %v358 = vmul.f32 %v357, 1.442695
    %v359 = vpow.pop %v358
    %v360 = vadd.f32 %v356, %v359
    %v361 = vlog2.pop %v360
    %v362 = vmul.f32 %v361, 0.6931472
    %v363 = vadd.f32 %v353, %v362
    %v364 = vsub.f32 %v350, %v363
    %v365 = vmul.f32 %v364, 1.442695
    %v366 = vpow.pop %v365
    %vm367 = vcmask 1024
    %368 = vst.msk [vmem:[#allocation7] sm:$0x3] %vm367, %v366
    %v369 = vmul.f32 %v320, 0.125
    %vm370 = vcmask 9224
    %371 = vst.msk [vmem:[#allocation7] sm:$0x3] %vm370, %v369
    // Predicated region
    $region18: #{tpu_custom_call.1} parent=1 // pred_check
      _
    $region19: #{tpu_custom_call.1} parent=1 // pred_check_branch
      %373 = sbr.rel (0) target = $region21
    $region20: #{tpu_custom_call.1} parent=1 // pred_region
      %s375 = ssub.s32 32, 32
      %376 = vsyncadd [#allocation4], %s375
      %s378 = sshll.u32 [#allocation7], 4
      %s379 = int_to_ptr.vmem [resolvable:$true] %s378
      %381 = dma.vmem_to_hbm [thread:$0]  %s379, 32, %s2, [#allocation4]
    $region21: #{tpu_custom_call.1} parent=1 // pred_fallthru
      _
    // Predicated region
    $region22: #{tpu_custom_call.1} parent=1 // pred_check
      _
    $region23: #{tpu_custom_call.1} parent=1 // pred_check_branch
      %383 = sbr.rel (0) target = $region25
    $region24: #{tpu_custom_call.1} parent=1 // pred_region
      %384 = dma.done [#allocation4], 32
    $region25: #{tpu_custom_call.1} parent=1 // pred_fallthru
      _
    %385 = vsyncpa [#allocation3], 1
    %386 = vsyncpa [#allocation4], 1
    %387 = vsyncpa [#allocation5], 1

</llo_original>
